<compile_context>
chip_gen: v5e
topology: v5e:2x2
jax: 0.10.0
libtpu: 0.0.40
codegen_flags: <defaults>
</compile_context>

<pallas_src>
import functools

import jax
import jax.numpy as jnp
from jax.experimental import pallas as pl
from jax.experimental.pallas import tpu as pltpu


def _round_up(x, m):
    return ((x + m - 1) // m) * m


def _proj_kernel(a_ref, w_ref, b_ref, o_ref):
    # a_ref: (tm, Kp) packed patch rows, w_ref: (Kp, Np) block-diag weight,
    # b_ref: (1, Np) packed f32 bias, o_ref: (tm, Np) lane-dense output.
    acc = jnp.dot(a_ref[...], w_ref[...], preferred_element_type=jnp.float32)
    o_ref[...] = (acc + b_ref[...]).astype(o_ref.dtype)


def _proj_matmul(patches, w_blk, bias_row, out_dtype, *, tm_max=2048):
    """(M, Kp) @ (Kp, Np) + bias -> (M, Np), tiled over rows only."""
    M, Kp = patches.shape
    Np = w_blk.shape[1]

    # Largest row tile that (a) amortizes the ~0.35us/grid-step overhead and
    # (b) still leaves >= 2 grid steps so the "parallel" axis can shard across
    # v7x's two TensorCores.  Ragged tail handled by the cdiv grid (no pad).
    tm = max(8, min(tm_max, _round_up(pl.cdiv(M, 2), 8), _round_up(M, 8)))
    grid = (pl.cdiv(M, tm),)

    cost = pl.CostEstimate(
        flops=2 * M * Kp * Np,
        transcendentals=0,
        bytes_accessed=(patches.dtype.itemsize * M * Kp
                        + w_blk.dtype.itemsize * Kp * Np
                        + bias_row.dtype.itemsize * Np
                        + jnp.dtype(out_dtype).itemsize * M * Np),
    )

    return pl.pallas_call(
        _proj_kernel,
        out_shape=jax.ShapeDtypeStruct((M, Np), out_dtype),
        grid_spec=pltpu.PrefetchScalarGridSpec(
            num_scalar_prefetch=0,
            grid=grid,
            # NOTE: pipeline_mode=pl.Buffered(1/3) on the resident/streaming
            # specs is a further (minor) sweep knob; left at defaults here.
            in_specs=[
                pl.BlockSpec((tm, Kp), lambda i: (i, 0)),   # streaming A rows
                pl.BlockSpec((Kp, Np), lambda i: (0, 0)),   # resident weight
                pl.BlockSpec((1, Np), lambda i: (0, 0)),    # resident bias
            ],
            out_specs=pl.BlockSpec((tm, Np), lambda i: (i, 0)),
        ),
        compiler_params=pltpu.CompilerParams(
            dimension_semantics=("parallel",),      # shards across v7x's 2 TCs
            vmem_limit_bytes=32 * 1024 * 1024,      # far above the ~3 MiB used
            # Allow XLA to fuse the patch-gather producer into this call's
            # input so the (M, Kp) matrix need not round-trip through HBM.
            allow_input_fusion=[True, False, False],
        ),
        cost_estimate=cost,
    )(patches, w_blk, bias_row)


@functools.partial(
    jax.jit, static_argnames=("patch_size", "inner_patches", "compute_dtype"))
def _patch_embed_forward(x, w_blk, bias_row, *, patch_size, inner_patches,
                         compute_dtype):
    B, C, H, W = x.shape
    ip = inner_patches
    cs = patch_size // ip
    pr0, pr1 = H // patch_size, W // patch_size
    num_patches = pr0 * pr1
    K = C * cs * cs
    E = w_blk.shape[1] // ip
    out_dtype = x.dtype

    # Cast BEFORE the gather: the intermediate (if materialized) is bf16.
    x = x.astype(compute_dtype)

    # Patch gather: rows come out directly in the final
    # (b, pr_row, pr_col, inner_row) order with inner_col folded into the
    # 128-lane axis, so no post-matmul permute / second HBM pass is needed.
    # TODO(synk): do this gather fully inside the kernel (per-(b, pr_row)
    # BlockSpec slab + in-VMEM reorder); the small-dim lane shuffle has no
    # robust Mosaic lowering today, so we rely on allow_input_fusion instead.
    p = x.reshape(B, C, pr0, ip, cs, pr1, ip, cs)
    p = jnp.transpose(p, (0, 2, 5, 3, 6, 1, 4, 7))      # (B,pr0,pr1,ir,ic,C,kr,kc)
    patches = p.reshape(B * num_patches * ip, ip * K)   # (M, ip*K)

    y = _proj_matmul(patches, w_blk, bias_row, out_dtype)   # (M, ip*E)

    # Free row-major reshape into the reference output layout (norm is None).
    return y.reshape(B, num_patches, ip, ip, E)


class PatchEmbedPallas:
    """JAX/Pallas re-implementation of hivit.PatchEmbed.forward (norm_layer=None)."""

    def __init__(self, img_size=16, patch_size=8, inner_patches=4,
                 in_chans=3, embed_dim=32, key=None,
                 compute_dtype=jnp.bfloat16):
        self.img_size = (img_size, img_size)
        self.patch_size = (patch_size, patch_size)
        self.inner_patches = inner_patches
        self.patches_resolution = (img_size // patch_size, img_size // patch_size)
        self.num_patches = self.patches_resolution[0] * self.patches_resolution[1]
        # NOTE: the PyTorch module hard-codes in_chans = 6 in __init__; the
        # constructor argument is ignored (quirk kept for parity).
        in_chans = 6
        self.in_chans = in_chans
        self.embed_dim = embed_dim
        cs = patch_size // inner_patches
        self.conv_size = (cs, cs)
        # bf16 matmul inputs (f32 accumulation, f32 bias) halve the dominant
        # input-side HBM bytes; output stays in the input dtype (f32 here),
        # matching the f32 reference to ~1e-2.
        self.compute_dtype = compute_dtype

        if key is None:
            key = jax.random.PRNGKey(0)
        kw, kb = jax.random.split(key)
        fan_in = in_chans * cs * cs
        bound = 1.0 / (fan_in ** 0.5)
        # Conv2d weight: (embed_dim, in_chans, cs, cs); bias: (embed_dim,)
        self.weight = jax.random.uniform(
            kw, (embed_dim, in_chans, cs, cs), jnp.float32, -bound, bound)
        self.bias = jax.random.uniform(
            kb, (embed_dim,), jnp.float32, -bound, bound)

        # Precomputed once (not per forward): block-diagonal weight packs the
        # ip inner-patch column groups into ip*embed_dim (=128) lanes for
        # unmasked 128-lane stores; bias stays f32 for the post-accum add.
        K = in_chans * cs * cs
        w_kn = self.weight.reshape(embed_dim, K).T                      # (K, E)
        eye = jnp.eye(inner_patches, dtype=w_kn.dtype)
        self.w_blk = jnp.kron(eye, w_kn).astype(compute_dtype)          # (ip*K, ip*E)
        self.bias_row = jnp.tile(self.bias, inner_patches)[None, :]     # (1, ip*E) f32

    def __call__(self, x):
        # x: (B, C, H, W) -- NCHW, matching the PyTorch reference.
        return _patch_embed_forward(
            x, self.w_blk, self.bias_row,
            patch_size=self.patch_size[0],
            inner_patches=self.inner_patches,
            compute_dtype=self.compute_dtype)


def _reference(x, weight, bias, inner_patches, cast_dtype=None):
    """lax conv + the reference module's view/permute/reshape."""
    E = weight.shape[0]
    cs = weight.shape[-1]
    if cast_dtype is not None:          # emulate reduced-precision inputs
        x = x.astype(cast_dtype).astype(jnp.float32)
        weight = weight.astype(cast_dtype).astype(jnp.float32)
    y = jax.lax.conv_general_dilated(
        x, weight, window_strides=(cs, cs), padding="VALID",
        dimension_numbers=("NCHW", "OIHW", "NCHW"))
    y = y + bias[None, :, None, None]
    B, _, Ho, Wo = y.shape
    ip = inner_patches
    pr0, pr1 = Ho // ip, Wo // ip
    y = y.reshape(B, E, pr0, ip, pr1, ip)
    y = jnp.transpose(y, (0, 2, 4, 3, 5, 1))
    return y.reshape(B, pr0 * pr1, ip, ip, E)


if __name__ == "__main__":
    key = jax.random.PRNGKey(0)
    k_x, k_p = jax.random.split(key)

    # Small shapes consistent with the module: img 16x16, patch 8, inner 4,
    # in_chans forced to 6 by the module, embed_dim 32.
    B, C, H, W = 2, 6, 16, 16
    x = jax.random.normal(k_x, (B, C, H, W), jnp.float32)

    # Default (bf16 compute) module.
    mod = PatchEmbedPallas(img_size=16, patch_size=8, inner_patches=4,
                           embed_dim=32, key=k_p)
    out = jax.block_until_ready(mod(x))

    # f32-compute module: exactness check of the packing / layout logic.
    mod_f32 = PatchEmbedPallas(img_size=16, patch_size=8, inner_patches=4,
                               embed_dim=32, key=k_p,
                               compute_dtype=jnp.float32)
    out_f32 = jax.block_until_ready(mod_f32(x))

    ref_f32 = _reference(x, mod.weight, mod.bias, mod.inner_patches)
    ref_bf16 = _reference(x, mod.weight, mod.bias, mod.inner_patches,
                          cast_dtype=jnp.bfloat16)

    pr = (H // mod.patch_size[0], W // mod.patch_size[1])
    expect_shape = (B, pr[0] * pr[1], mod.inner_patches, mod.inner_patches,
                    mod.embed_dim)
    assert out.shape == expect_shape
    assert out_f32.shape == expect_shape
    # f32 path matches the f32 reference tightly.
    assert jnp.allclose(out_f32, ref_f32, atol=1e-3, rtol=1e-3)
    # bf16 path matches a bf16-input / f32-accum reference tightly...
    assert jnp.allclose(out, ref_bf16, atol=5e-3, rtol=5e-3)
    # ...and the full-f32 reference within bf16 input-rounding error.
    assert jnp.allclose(out, ref_f32, atol=5e-2, rtol=5e-2)

    print("KERNEL_OK")
</pallas_src>

<mosaic_0001>
module attributes {stable_mosaic.version = 11 : i64} {
  func.func @_proj_kernel(%arg0: i32, %arg1: memref<16x96xbf16, #tpu.memory_space<vmem>>, %arg2: memref<96x128xbf16, #tpu.memory_space<vmem>>, %arg3: memref<1x128xf32, #tpu.memory_space<vmem>>, %arg4: memref<16x128xf32, #tpu.memory_space<vmem>>) attributes {dimension_semantics = [#tpu.dimension_semantics<parallel>], iteration_bounds = array<i64: 2>, scalar_prefetch = 0 : i64, scratch_operands = 0 : i64, tpu.core_type = #tpu.core_type<tc>, window_params = [{transform_indices = @transform_0, window_bounds = array<i64: 16, 96>}, {pipeline_mode = #tpu.pipeline_mode<synchronous>, transform_indices = @transform_1, window_bounds = array<i64: 96, 128>}, {pipeline_mode = #tpu.pipeline_mode<synchronous>, transform_indices = @transform_2, window_bounds = array<i64: 1, 128>}, {transform_indices = @transform_3, window_bounds = array<i64: 16, 128>}]} {
    %c0 = arith.constant 0 : index
    %c0_0 = arith.constant 0 : index
    %0 = vector.load %arg1[%c0, %c0_0] : memref<16x96xbf16, #tpu.memory_space<vmem>>, vector<16x96xbf16>
    %c0_1 = arith.constant 0 : index
    %c0_2 = arith.constant 0 : index
    %1 = vector.load %arg2[%c0_1, %c0_2] : memref<96x128xbf16, #tpu.memory_space<vmem>>, vector<96x128xbf16>
    %cst = arith.constant dense<0.000000e+00> : vector<16x128xf32>
    %2 = tpu.matmul %0, %1, %cst {dimension_numbers = #tpu.dot_dimension_numbers<[1], [0], [0], [1], [0, 0, 1, 1], [], []>} : vector<16x96xbf16>, vector<96x128xbf16>, vector<16x128xf32> -> vector<16x128xf32>
    %c0_3 = arith.constant 0 : index
    %c0_4 = arith.constant 0 : index
    %3 = vector.load %arg3[%c0_3, %c0_4] : memref<1x128xf32, #tpu.memory_space<vmem>>, vector<1x128xf32>
    %4 = vector.broadcast %3 : vector<1x128xf32> to vector<16x128xf32>
    %5 = arith.addf %2, %4 : vector<16x128xf32>
    %c0_5 = arith.constant 0 : index
    %c0_6 = arith.constant 0 : index
    %6 = vector.load %arg4[%c0_5, %c0_6] : memref<16x128xf32, #tpu.memory_space<vmem>>, vector<16x128xf32>
    tpu.vector_store %arg4[%c0_5, %c0_6], %5 {strides = array<i32>} : memref<16x128xf32, #tpu.memory_space<vmem>>, vector<16x128xf32>,
    return
  }
  func.func @transform_0(%arg0: i32) -> (i32, i32) {
    %c0_i32 = arith.constant 0 : i32
    %c0_i32_0 = arith.constant 0 : i32
    return %arg0, %c0_i32 : i32, i32
  }
  func.func @transform_1(%arg0: i32) -> (i32, i32) {
    %c0_i32 = arith.constant 0 : i32
    %c0_i32_0 = arith.constant 0 : i32
    %c0_i32_1 = arith.constant 0 : i32
    return %c0_i32, %c0_i32_0 : i32, i32
  }
  func.func @transform_2(%arg0: i32) -> (i32, i32) {
    %c0_i32 = arith.constant 0 : i32
    %c0_i32_0 = arith.constant 0 : i32
    %c0_i32_1 = arith.constant 0 : i32
    return %c0_i32, %c0_i32_0 : i32, i32
  }
  func.func @transform_3(%arg0: i32) -> (i32, i32) {
    %c0_i32 = arith.constant 0 : i32
    %c0_i32_0 = arith.constant 0 : i32
    return %arg0, %c0_i32 : i32, i32
  }
}

</mosaic_0001>

<llo_original>
// kernel: _patch_embed_forward.1
$region0: #{_patch_embed_forward.1}
  #allocation0 [shape = 'u32[]', space=smem, size = 0x4, offset = 0x4, fixed_abs, tag = 'smem constant byte address 0x4 - core index']
  #allocation1 [shape = 'u32[72,128]{1,0:T(1,128)}', space=vmem, size = 0x9000, scoped, tag = 'internal scratch']
  %s0 = inlined_call_operand.vmem [shape: bf16[32,96], index: 0, kind: input, shape index: {}]
  %s1 = inlined_call_operand.vmem [shape: bf16[96,128], index: 1, kind: input, shape index: {}]
  %s2 = inlined_call_operand.vmem [shape: f32[1,128], index: 2, kind: input, shape index: {}]
  %s3 = inlined_call_operand.vmem [shape: f32[32,128], index: 3, kind: output, shape index: {}]
  %s4 = sld [smem:[#allocation0]]
  $region45: #{_patch_embed_forward.1} parent=0
    _
  %s6 = ssub.s32 1, %s4
  %s7 = scalar_select 0, %s6, %s4
  loop: start=0, step=1, limit=4
  $region2: #{_patch_embed_forward.1} parent=0 // loop_pre_header
    _
  $region3: #{_patch_embed_forward.1} parent=0 // loop_header
    %s9 = sphi 0, %s13
    %p10 = scmp.ge.s32.totalorder %s9, 4
    %s19 = sphi 0, %s21
    %s22 = sphi 0, %s19
    %s23 = sphi 0, %s22
    %s39 = sphi 0, %s23
    %s43 = sphi 0, %s43
    %s45 = sphi 0, %s43
    %s46 = sphi 0, %s45
    %s60 = sphi 0, %s46
    %s64 = sphi 0, %s64
    %s66 = sphi 0, %s64
    %s67 = sphi 0, %s66
    %s81 = sphi 0, %s67
    %s87 = sphi 0, %s89
    %s90 = sphi 0, %s87
    %s91 = sphi 0, %s90
    %s107 = sphi 0, %s91
  $region4: #{_patch_embed_forward.1} parent=0 // loop_header_branch
    %12 = sbr.rel (%p10) target = $region8
  $region5: #{_patch_embed_forward.1} parent=0 // loop_body
    %s14 = ssub.s32 %s9, 1
    %s15 = ssub.s32 %s9, 2
    %s16 = sadd.s32 %s9, 1
    %s17 = ssub.s32 %s9, %s16
    %p18 = scmp.eq.s32.totalorder %s17, 0
    %s20 = sadd.s32 %s19, 1
    %s21 = scalar_select %p18, %s19, %s20
    %p24 = pneg %p18
    %p25 = scmp.eq.s32.totalorder %s9, 1
    %p26 = por %p24, %p25
    %p27 = scmp.ne.s32.totalorder %s19, %s22
    %p28 = scmp.eq.s32.totalorder %s9, 0
    %p29 = por %p27, %p28
    %p30 = scmp.ne.s32.totalorder %s19, %s22
    %p31 = scmp.eq.s32.totalorder %s14, 1
    %p32 = por %p30, %p31
    %p33 = scmp.ne.s32.totalorder %s22, %s23
    %p34 = scmp.eq.s32.totalorder %s14, 0
    %p35 = por %p33, %p34
    %p36 = scmp.ne.s32.totalorder %s22, %s23
    %p37 = scmp.eq.s32.totalorder %s15, 1
    %p38 = por %p36, %p37
    %p40 = scmp.ne.s32.totalorder %s23, %s39
    %p41 = scmp.eq.s32.totalorder %s15, 0
    %p42 = por %p40, %p41
    %s44 = sadd.s32 %s43, 1
    %p47 = scmp.eq.s32.totalorder %s9, 1
    %p48 = scmp.ne.s32.totalorder %s43, %s45
    %p49 = scmp.eq.s32.totalorder %s9, 0
    %p50 = por %p48, %p49
    %p51 = scmp.ne.s32.totalorder %s43, %s45
    %p52 = scmp.eq.s32.totalorder %s14, 1
    %p53 = por %p51, %p52
    %p54 = scmp.ne.s32.totalorder %s45, %s46
    %p55 = scmp.eq.s32.totalorder %s14, 0
    %p56 = por %p54, %p55
    %p57 = scmp.ne.s32.totalorder %s45, %s46
    %p58 = scmp.eq.s32.totalorder %s15, 1
    %p59 = por %p57, %p58
    %p61 = scmp.ne.s32.totalorder %s46, %s60
    %p62 = scmp.eq.s32.totalorder %s15, 0
    %p63 = por %p61, %p62
    %s65 = sadd.s32 %s64, 1
    %p68 = scmp.eq.s32.totalorder %s9, 1
    %p69 = scmp.ne.s32.totalorder %s64, %s66
    %p70 = scmp.eq.s32.totalorder %s9, 0
    %p71 = por %p69, %p70
    %p72 = scmp.ne.s32.totalorder %s64, %s66
    %p73 = scmp.eq.s32.totalorder %s14, 1
    %p74 = por %p72, %p73
    %p75 = scmp.ne.s32.totalorder %s66, %s67
    %p76 = scmp.eq.s32.totalorder %s14, 0
    %p77 = por %p75, %p76
    %p78 = scmp.ne.s32.totalorder %s66, %s67
    %p79 = scmp.eq.s32.totalorder %s15, 1
    %p80 = por %p78, %p79
    %p82 = scmp.ne.s32.totalorder %s67, %s81
    %p83 = scmp.eq.s32.totalorder %s15, 0
    %p84 = por %p82, %p83
    %s85 = ssub.s32 %s9, %s16
    %p86 = scmp.eq.s32.totalorder %s85, 0
    %s88 = sadd.s32 %s87, 1
    %s89 = scalar_select %p86, %s87, %s88
    %p92 = pneg %p86
    %p93 = scmp.eq.s32.totalorder %s9, 1
    %p94 = por %p92, %p93
    %p95 = scmp.ne.s32.totalorder %s87, %s90
    %p96 = scmp.eq.s32.totalorder %s9, 0
    %p97 = por %p95, %p96
    %p98 = scmp.ne.s32.totalorder %s87, %s90
    %p99 = scmp.eq.s32.totalorder %s14, 1
    %p100 = por %p98, %p99
    %p101 = scmp.ne.s32.totalorder %s90, %s91
    %p102 = scmp.eq.s32.totalorder %s14, 0
    %p103 = por %p101, %p102
    %p104 = scmp.ne.s32.totalorder %s90, %s91
    %p105 = scmp.eq.s32.totalorder %s15, 1
    %p106 = por %p104, %p105
    %p108 = scmp.ne.s32.totalorder %s91, %s107
    %p109 = scmp.eq.s32.totalorder %s15, 0
    %p110 = por %p108, %p109
    %p111 = scmp.le.s32.totalorder 1, %s9
    %p112 = scmp.lt.s32.totalorder %s9, 3
    %p113 = pnand %p111, %p112
    %p114 = pneg %p113
    // Predicated region
    $region9: #{_patch_embed_forward.1} parent=5 // pred_check
      _
    $region10: #{_patch_embed_forward.1} parent=5 // pred_check_branch
      %116 = sbr.rel (%p113) target = $region12
    $region11: #{_patch_embed_forward.1} parent=5 // pred_region
      %s117 = ssub.s32 %s9, 1
      // Predicated region
      $region13: #{_patch_embed_forward.1} parent=11 // pred_check
        %p118 = pneg %p56
      $region14: #{_patch_embed_forward.1} parent=11 // pred_check_branch
        %120 = sbr.rel (%p118) target = $region16
      $region15: #{_patch_embed_forward.1} parent=11 // pred_region
        _
      $region16: #{_patch_embed_forward.1} parent=11 // pred_fallthru
        _
      // Predicated region
      $region17: #{_patch_embed_forward.1} parent=11 // pred_check
        %p121 = pneg %p77
      $region18: #{_patch_embed_forward.1} parent=11 // pred_check_branch
        %123 = sbr.rel (%p121) target = $region20
      $region19: #{_patch_embed_forward.1} parent=11 // pred_region
        _
      $region20: #{_patch_embed_forward.1} parent=11 // pred_fallthru
        _
    $region12: #{_patch_embed_forward.1} parent=5 // pred_fallthru
      _
    %p124 = scmp.lt.s32.totalorder %s9, 2
    // Predicated region
    $region21: #{_patch_embed_forward.1} parent=5 // pred_check
      %p125 = pneg %p124
    $region22: #{_patch_embed_forward.1} parent=5 // pred_check_branch
      %127 = sbr.rel (%p125) target = $region24
    $region23: #{_patch_embed_forward.1} parent=5 // pred_region
      // Predicated region
      $region25: #{_patch_embed_forward.1} parent=23 // pred_check
        %p128 = pneg %p29
      $region26: #{_patch_embed_forward.1} parent=23 // pred_check_branch
        %130 = sbr.rel (%p128) target = $region28
      $region27: #{_patch_embed_forward.1} parent=23 // pred_region
        %s131 = smul.u32 2, %s9
        %p132 = scmp.lt.s32.totalorder %s131, 3
        %s133 = scalar_select %p132, %s131, 3
        %s134 = smul.addr %s133, 4
        %s135 = scalar_lea.vmem %s0, %s134
        %s136 = smul.u32 2, %s9
      $region28: #{_patch_embed_forward.1} parent=23 // pred_fallthru
        _
    $region24: #{_patch_embed_forward.1} parent=5 // pred_fallthru
      _
    %p137 = scmp.le.s32.totalorder 1, %s9
    %p138 = scmp.lt.s32.totalorder %s9, 3
    %p139 = pnand %p137, %p138
    %p140 = pneg %p139
    // Predicated region
    $region29: #{_patch_embed_forward.1} parent=5 // pred_check
      _
    $region30: #{_patch_embed_forward.1} parent=5 // pred_check_branch
      %142 = sbr.rel (%p139) target = $region32
    $region31: #{_patch_embed_forward.1} parent=5 // pred_region
      %s143 = ssub.s32 %s9, 1
      %s144 = smul.u32 2, %s14
      %p145 = scmp.lt.s32.totalorder %s144, 3
      %s146 = scalar_select %p145, %s144, 3
      %s147 = smul.addr %s146, 4
      %s148 = scalar_lea.vmem %s0, %s147
      %p149 = pneg %p35
      %p150 = pneg %p32
      %p151 = pneg %p56
      %p152 = pneg %p53
      %p153 = pneg %p77
      %p154 = pneg %p74
      %p155 = pneg %p103
      %p156 = pneg %p100
      %s157 = smul.u32 2, %s14
      %p158 = scmp.lt.s32.totalorder %s157, 3
      %s159 = scalar_select %p158, %s157, 3
      %s160 = smul.addr %s159, 8
      %s161 = scalar_lea.vmem %s3, %s160
      %s162 = smul.u32 2, %s14
      %p163 = scmp.lt.s32.totalorder %s162, 3
      %s164 = scalar_select %p163, %s162, 3
      %s165 = smul.addr %s164, 4
      %s166 = scalar_lea.vmem %s0, %s165
      %s167 = smul.u32 2, %s14
      %s168 = smul.u32 2, %s14
      %p169 = scmp.lt.s32.totalorder %s168, 3
      %s170 = scalar_select %p169, %s168, 3
      %s171 = smul.addr %s170, 8
      %s172 = scalar_lea.vmem %s3, %s171
      %s173 = smul.u32 2, %s14
      %v175 = vld [vmem:[%s166] sm:$0xf]
      %v176 = vld [vmem:[%s166 + $0x4] sm:$0xf]
      %v177 = vld [vmem:[%s1] sm:$0xf]
      %v178 = vld [vmem:[%s1 + $0x4] sm:$0xf]
      %v179 = vld [vmem:[%s1 + $0x8] sm:$0xf]
      %v180 = vld [vmem:[%s1 + $0xc] sm:$0xf]
      %v181 = vld [vmem:[%s1 + $0x10] sm:$0xf]
      %v182 = vld [vmem:[%s1 + $0x14] sm:$0xf]
      %v183 = vld [vmem:[%s1 + $0x18] sm:$0xf]
      %v184 = vld [vmem:[%s1 + $0x1c] sm:$0xf]
      %v185 = vld [vmem:[%s1 + $0x20] sm:$0xf]
      %v186 = vld [vmem:[%s1 + $0x24] sm:$0xf]
      %v187 = vld [vmem:[%s1 + $0x28] sm:$0xf]
      %v188 = vld [vmem:[%s1 + $0x2c] sm:$0xf]
      %v189 = vld [vmem:[%s2] sm:$0x1]
      %v191 = vperm.slane %v189, 0
      %v195 = vunpack.c.l.b16 %v175
      %v196 = vunpack.c.l.b16 %v176
      %v197 = vpack.c.b16 %v196, %v195
      %v210 = vunpack.c.l.b16 %v177
      %v211 = vunpack.c.l.b16 %v178
      %v212 = vunpack.c.l.b16 %v179
      %v213 = vunpack.c.l.b16 %v180
      %v214 = vunpack.c.l.b16 %v181
      %v215 = vunpack.c.l.b16 %v182
      %v216 = vunpack.c.l.b16 %v183
      %v217 = vunpack.c.l.b16 %v184
      %v218 = vunpack.c.l.b16 %v185
      %v219 = vunpack.c.l.b16 %v186
      %v220 = vunpack.c.l.b16 %v187
      %v221 = vunpack.c.l.b16 %v188
      %v222 = vpack.c.b16 %v211, %v210
      %v223 = vpack.c.b16 %v213, %v212
      %v224 = vpack.c.b16 %v215, %v214
      %v225 = vpack.c.b16 %v217, %v216
      %v226 = vpack.c.b16 %v219, %v218
      %v227 = vpack.c.b16 %v221, %v220
      %vm234 = vcmask 785408
      %v236 = vsel %vm234, %v197, 0
      %238 = vmatpush.bf16.msra.mxu0 0
      %239 = vmatpush.bf16.msra.mxu0 0
      %240 = vmatpush.bf16.msra.mxu0 %v227
      %241 = vmatpush.bf16.msra.mxu0 %v226
      %242 = vmatpush.bf16.msra.mxu0 %v225
      %243 = vmatpush.bf16.msra.mxu0 %v224
      %244 = vmatpush.bf16.msra.mxu0 %v223
      %245 = vmatpush.bf16.msra.mxu0 %v222
      %246 = vmatmul.bf16.gmra.mxu0 %v236
      %v247 = vpop.f32.mrf.mxu0
      %v248 = vadd.f32 %v191, %v247
      %v249 = vpop.f32.mrf.mxu0
      %v250 = vadd.f32 %v191, %v249
      %251 = vdwg.mxu0
      %252 = vst [vmem:[%s172] sm:$0xff] %v248
      %253 = vst [vmem:[%s172 + $0x8] sm:$0xff] %v250
      %s254 = smul.u32 2, %s14
      %p255 = scmp.lt.s32.totalorder %s254, 3
      %s256 = scalar_select %p255, %s254, 3
      %s257 = smul.addr %s256, 8
      %s258 = scalar_lea.vmem %s3, %s257
      // Predicated region
      $region33: #{_patch_embed_forward.1} parent=31 // pred_check
        %p259 = pneg %p100
      $region34: #{_patch_embed_forward.1} parent=31 // pred_check_branch
        %261 = sbr.rel (%p259) target = $region36
      $region35: #{_patch_embed_forward.1} parent=31 // pred_region
        %s262 = smul.u32 2, %s14
      $region36: #{_patch_embed_forward.1} parent=31 // pred_fallthru
        _
    $region32: #{_patch_embed_forward.1} parent=5 // pred_fallthru
      _
    %p263 = scmp.le.s32.totalorder 2, %s9
    // Predicated region
    $region37: #{_patch_embed_forward.1} parent=5 // pred_check
      %p264 = pneg %p263
    $region38: #{_patch_embed_forward.1} parent=5 // pred_check_branch
      %266 = sbr.rel (%p264) target = $region40
    $region39: #{_patch_embed_forward.1} parent=5 // pred_region
      %s267 = ssub.s32 %s9, 2
      // Predicated region
      $region41: #{_patch_embed_forward.1} parent=39 // pred_check
        %p268 = pneg %p106
      $region42: #{_patch_embed_forward.1} parent=39 // pred_check_branch
        %270 = sbr.rel (%p268) target = $region44
      $region43: #{_patch_embed_forward.1} parent=39 // pred_region
        %s271 = smul.u32 2, %s15
        %p272 = scmp.lt.s32.totalorder %s271, 3
        %s273 = scalar_select %p272, %s271, 3
        %s274 = smul.addr %s273, 8
        %s275 = scalar_lea.vmem %s3, %s274
      $region44: #{_patch_embed_forward.1} parent=39 // pred_fallthru
        _
    $region40: #{_patch_embed_forward.1} parent=5 // pred_fallthru
      _
  $region6: #{_patch_embed_forward.1} parent=0 // loop_footer
    %s13 = sadd.s32 1, %s9
  $region7: #{_patch_embed_forward.1} parent=0 // loop_footer_branch
    %8 = sbr.rel target = $region3
  $region8: #{_patch_embed_forward.1} parent=0 // loop_exit
    _

</llo_original>
